<compile_context>
chip_gen: v7x
topology: tpu7x:2x2x1
jax: 0.10.0
libtpu: 0.0.40
codegen_flags: <defaults>
</compile_context>

<pallas_src>
import numpy as np
import jax
import jax.numpy as jnp
from jax.experimental import pallas as pl
from jax.experimental.pallas import tpu as pltpu


def _spectral_mul_kernel(x_ref, w_ref, o_ref):
    # x_ref : (2, B,   Cin,  TM)   real/imag planes of the truncated x_ft modes
    # w_ref : (2, Cin, Cout, TM)   real/imag planes of the spectral weights
    # o_ref : (2, B,   Cout, TM)   real/imag planes of the output modes
    _, b, cin, tm = x_ref.shape
    cout = o_ref.shape[2]

    acc_r = jnp.zeros((b, cout, tm), jnp.float32)
    acc_i = jnp.zeros((b, cout, tm), jnp.float32)

    # Unrolled VPU contraction over Cin (modes live on lanes, Cout on sublanes).
    for i in range(cin):
        xr_i = x_ref[0, :, i, :][:, None, :]      # (B, 1, TM)
        xi_i = x_ref[1, :, i, :][:, None, :]      # (B, 1, TM)
        wr_i = w_ref[0, i][None, :, :]            # (1, Cout, TM)
        wi_i = w_ref[1, i][None, :, :]            # (1, Cout, TM)
        # naive 4-product complex multiply-accumulate (VPU, f32)
        acc_r = acc_r + xr_i * wr_i - xi_i * wi_i
        acc_i = acc_i + xr_i * wi_i + xi_i * wr_i

    o_ref[0] = acc_r                              # lane-dense, unmasked stores
    o_ref[1] = acc_i


def _choose_tiling(M2, B, Cin, Cout, budget_bytes=16 << 20):
    """Pick a 128-lane-aligned mode tile.

    Returns (tm, n_tiles, M2_padded).  The VMEM model accounts for (8,128) tile
    padding of the second-to-last block dims (Cin / Cout) and double buffering.
    """
    LANE = 128
    pad8 = lambda n: ((n + 7) // 8) * 8
    n_groups = pl.cdiv(M2, LANE)                  # number of 128-lane groups
    # f32 bytes of one double-buffered 128-lane group (re/im packed, 3 streams)
    per_group = 2 * 4 * LANE * 2 * (
        B * pad8(Cin) + Cin * pad8(Cout) + B * pad8(Cout))
    max_groups = max(1, budget_bytes // per_group)
    groups_per_tile = min(n_groups, max_groups)
    # keep >= 2 grid blocks when possible so v7x's 2nd TensorCore gets work
    if n_groups >= 2:
        groups_per_tile = min(groups_per_tile, pl.cdiv(n_groups, 2))
    n_tiles = pl.cdiv(n_groups, groups_per_tile)
    tm = groups_per_tile * LANE
    return tm, n_tiles, n_tiles * tm


def _spectral_mul_pallas(xs, ws, tm, n_tiles):
    """xs: (2, B, Cin, M2p) f32, ws: (2, Cin, Cout, M2p) f32 -> (2, B, Cout, M2p) f32."""
    _, B, Cin, M2p = xs.shape
    Cout = ws.shape[2]

    return pl.pallas_call(
        _spectral_mul_kernel,
        grid=(n_tiles,),
        in_specs=[
            pl.BlockSpec((2, B, Cin, tm), lambda m: (0, 0, 0, m)),
            pl.BlockSpec((2, Cin, Cout, tm), lambda m: (0, 0, 0, m)),
        ],
        out_specs=pl.BlockSpec((2, B, Cout, tm), lambda m: (0, 0, 0, m)),
        out_shape=jax.ShapeDtypeStruct((2, B, Cout, M2p), jnp.float32),
        compiler_params=pltpu.CompilerParams(
            dimension_semantics=("parallel",),
            vmem_limit_bytes=48 << 20,
        ),
    )(xs, ws)


def spectral_conv2d(x, weights1, weights2, modes1, modes2):
    """Forward pass of SpectralConv2d.  x: (B, Cin, H, W) f32 -> (B, Cout, H, W) f32."""
    B, Cin, H, W = x.shape
    Cout = weights1.shape[1]
    Wh = W // 2 + 1
    M2 = 2 * modes1 * modes2

    # FFT (glue, XLA FFT)
    x_ft = jnp.fft.rfft2(x)                                   # (B, Cin, H, Wh) c64

    # gather the two retained mode blocks, fold into one mode axis (last = lanes)
    top = x_ft[:, :, :modes1, :modes2]                        # (B, Cin, m1, m2)
    bot = x_ft[:, :, H - modes1:, :modes2]                    # (B, Cin, m1, m2)
    xm = jnp.concatenate([top, bot], axis=2).reshape(B, Cin, M2)
    xs = jnp.stack([jnp.real(xm), jnp.imag(xm)], axis=0).astype(jnp.float32)

    wm = jnp.concatenate([weights1, weights2], axis=2).reshape(Cin, Cout, M2)
    ws = jnp.stack([jnp.real(wm), jnp.imag(wm)], axis=0).astype(jnp.float32)

    # lane-align the mode axis (zero modes multiply to zero -> results unchanged)
    tm, n_tiles, M2p = _choose_tiling(M2, B, Cin, Cout)
    pad = M2p - M2
    if pad:
        xs = jnp.pad(xs, ((0, 0), (0, 0), (0, 0), (0, pad)))
        ws = jnp.pad(ws, ((0, 0), (0, 0), (0, 0), (0, pad)))

    # hot path: complex channel mixing per retained mode (VPU, Pallas)
    out = _spectral_mul_pallas(xs, ws, tm, n_tiles)           # (2, B, Cout, M2p)
    out = out[:, :, :, :M2]
    out_c = jax.lax.complex(out[0], out[1])                   # (B, Cout, M2) c64
    out_c = out_c.reshape(B, Cout, 2 * modes1, modes2)

    # scatter back into the full spectrum and inverse FFT (glue, XLA).
    # TODO(synk): fuse the input gather and this scatter into the kernel's
    # BlockSpec index_maps (+ input_output_aliases on a pre-zeroed spectrum) to
    # drop the extra XLA-side HBM passes over the truncated spectrum.
    out_ft = jnp.zeros((B, Cout, H, Wh), dtype=jnp.complex64)
    out_ft = out_ft.at[:, :, :modes1, :modes2].set(out_c[:, :, :modes1, :])
    out_ft = out_ft.at[:, :, H - modes1:, :modes2].set(out_c[:, :, modes1:, :])
    return jnp.fft.irfft2(out_ft, s=(H, W))


def _reference(x, weights1, weights2, modes1, modes2):
    """Pure-JAX reference mirroring the PyTorch forward."""
    B, Cin, H, W = x.shape
    Cout = weights1.shape[1]
    x_ft = jnp.fft.rfft2(x)
    out_ft = jnp.zeros((B, Cout, H, W // 2 + 1), dtype=jnp.complex64)
    out_ft = out_ft.at[:, :, :modes1, :modes2].set(
        jnp.einsum('bixy,ioxy->boxy', x_ft[:, :, :modes1, :modes2], weights1))
    out_ft = out_ft.at[:, :, H - modes1:, :modes2].set(
        jnp.einsum('bixy,ioxy->boxy', x_ft[:, :, H - modes1:, :modes2], weights2))
    return jnp.fft.irfft2(out_ft, s=(H, W))


if __name__ == "__main__":
    # small shapes consistent with the module
    B, Cin, Cout = 2, 4, 4
    H = W = 16
    modes1 = modes2 = 4

    key = jax.random.PRNGKey(0)
    kx, k1r, k1i, k2r, k2i = jax.random.split(key, 5)

    x = jax.random.normal(kx, (B, Cin, H, W), dtype=jnp.float32)

    # weights = scale * rand(..., dtype=cfloat): uniform [0,1) real & imag parts
    scale = 1.0 / (Cin * Cout)
    w1 = (scale * (jax.random.uniform(k1r, (Cin, Cout, modes1, modes2), dtype=jnp.float32)
                   + 1j * jax.random.uniform(k1i, (Cin, Cout, modes1, modes2), dtype=jnp.float32))
          ).astype(jnp.complex64)
    w2 = (scale * (jax.random.uniform(k2r, (Cin, Cout, modes1, modes2), dtype=jnp.float32)
                   + 1j * jax.random.uniform(k2i, (Cin, Cout, modes1, modes2), dtype=jnp.float32))
          ).astype(jnp.complex64)

    fwd = jax.jit(spectral_conv2d, static_argnums=(3, 4))
    out = jax.block_until_ready(fwd(x, w1, w2, modes1, modes2))

    ref = jax.block_until_ready(_reference(x, w1, w2, modes1, modes2))
    assert out.shape == (B, Cout, H, W)
    np.testing.assert_allclose(np.asarray(out), np.asarray(ref), atol=1e-4, rtol=1e-4)

    print("KERNEL_OK")
</pallas_src>

<mosaic_0001>
module attributes {stable_mosaic.version = 11 : i64} {
  func.func @_spectral_mul_kernel(%arg0: i32, %arg1: memref<2x2x4x128xf32, #tpu.memory_space<vmem>>, %arg2: memref<2x4x4x128xf32, #tpu.memory_space<vmem>>, %arg3: memref<2x2x4x128xf32, #tpu.memory_space<vmem>>) attributes {dimension_semantics = [#tpu.dimension_semantics<parallel>], iteration_bounds = array<i64: 1>, scalar_prefetch = 0 : i64, scratch_operands = 0 : i64, tpu.core_type = #tpu.core_type<tc>, window_params = [{transform_indices = @transform_0, window_bounds = array<i64: 2, 2, 4, 128>}, {transform_indices = @transform_1, window_bounds = array<i64: 2, 4, 4, 128>}, {transform_indices = @transform_2, window_bounds = array<i64: 2, 2, 4, 128>}]} {
    %cst = arith.constant 0.000000e+00 : f32
    %0 = vector.broadcast %cst : f32 to vector<2x4x128xf32>
    %cst_0 = arith.constant 0.000000e+00 : f32
    %1 = vector.broadcast %cst_0 : f32 to vector<2x4x128xf32>
    %c0 = arith.constant 0 : index
    %c0_1 = arith.constant 0 : index
    %c0_2 = arith.constant 0 : index
    %c0_3 = arith.constant 0 : index
    %2 = vector.load %arg1[%c0, %c0_1, %c0_2, %c0_3] : memref<2x2x4x128xf32, #tpu.memory_space<vmem>>, vector<1x2x1x128xf32>
    %3 = vector.shape_cast %2 : vector<1x2x1x128xf32> to vector<2x128xf32>
    %4 = vector.shape_cast %3 : vector<2x128xf32> to vector<2x1x128xf32>
    %c1 = arith.constant 1 : index
    %c0_4 = arith.constant 0 : index
    %c0_5 = arith.constant 0 : index
    %c0_6 = arith.constant 0 : index
    %5 = vector.load %arg1[%c1, %c0_4, %c0_5, %c0_6] : memref<2x2x4x128xf32, #tpu.memory_space<vmem>>, vector<1x2x1x128xf32>
    %6 = vector.shape_cast %5 : vector<1x2x1x128xf32> to vector<2x128xf32>
    %7 = vector.shape_cast %6 : vector<2x128xf32> to vector<2x1x128xf32>
    %c0_7 = arith.constant 0 : index
    %c0_8 = arith.constant 0 : index
    %c0_9 = arith.constant 0 : index
    %c0_10 = arith.constant 0 : index
    %8 = vector.load %arg2[%c0_7, %c0_8, %c0_9, %c0_10] : memref<2x4x4x128xf32, #tpu.memory_space<vmem>>, vector<1x1x4x128xf32>
    %9 = vector.shape_cast %8 : vector<1x1x4x128xf32> to vector<4x128xf32>
    %10 = vector.shape_cast %9 : vector<4x128xf32> to vector<1x4x128xf32>
    %c1_11 = arith.constant 1 : index
    %c0_12 = arith.constant 0 : index
    %c0_13 = arith.constant 0 : index
    %c0_14 = arith.constant 0 : index
    %11 = vector.load %arg2[%c1_11, %c0_12, %c0_13, %c0_14] : memref<2x4x4x128xf32, #tpu.memory_space<vmem>>, vector<1x1x4x128xf32>
    %12 = vector.shape_cast %11 : vector<1x1x4x128xf32> to vector<4x128xf32>
    %13 = vector.shape_cast %12 : vector<4x128xf32> to vector<1x4x128xf32>
    %14 = vector.broadcast %4 : vector<2x1x128xf32> to vector<2x4x128xf32>
    %15 = vector.broadcast %10 : vector<1x4x128xf32> to vector<2x4x128xf32>
    %16 = arith.mulf %14, %15 : vector<2x4x128xf32>
    %17 = arith.addf %0, %16 : vector<2x4x128xf32>
    %18 = vector.broadcast %7 : vector<2x1x128xf32> to vector<2x4x128xf32>
    %19 = vector.broadcast %13 : vector<1x4x128xf32> to vector<2x4x128xf32>
    %20 = arith.mulf %18, %19 : vector<2x4x128xf32>
    %21 = arith.subf %17, %20 : vector<2x4x128xf32>
    %22 = vector.broadcast %4 : vector<2x1x128xf32> to vector<2x4x128xf32>
    %23 = vector.broadcast %13 : vector<1x4x128xf32> to vector<2x4x128xf32>
    %24 = arith.mulf %22, %23 : vector<2x4x128xf32>
    %25 = arith.addf %1, %24 : vector<2x4x128xf32>
    %26 = vector.broadcast %7 : vector<2x1x128xf32> to vector<2x4x128xf32>
    %27 = vector.broadcast %10 : vector<1x4x128xf32> to vector<2x4x128xf32>
    %28 = arith.mulf %26, %27 : vector<2x4x128xf32>
    %29 = arith.addf %25, %28 : vector<2x4x128xf32>
    %c0_15 = arith.constant 0 : index
    %c0_16 = arith.constant 0 : index
    %c1_17 = arith.constant 1 : index
    %c0_18 = arith.constant 0 : index
    %30 = vector.load %arg1[%c0_15, %c0_16, %c1_17, %c0_18] : memref<2x2x4x128xf32, #tpu.memory_space<vmem>>, vector<1x2x1x128xf32>
    %31 = vector.shape_cast %30 : vector<1x2x1x128xf32> to vector<2x128xf32>
    %32 = vector.shape_cast %31 : vector<2x128xf32> to vector<2x1x128xf32>
    %c1_19 = arith.constant 1 : index
    %c0_20 = arith.constant 0 : index
    %c1_21 = arith.constant 1 : index
    %c0_22 = arith.constant 0 : index
    %33 = vector.load %arg1[%c1_19, %c0_20, %c1_21, %c0_22] : memref<2x2x4x128xf32, #tpu.memory_space<vmem>>, vector<1x2x1x128xf32>
    %34 = vector.shape_cast %33 : vector<1x2x1x128xf32> to vector<2x128xf32>
    %35 = vector.shape_cast %34 : vector<2x128xf32> to vector<2x1x128xf32>
    %c0_23 = arith.constant 0 : index
    %c1_24 = arith.constant 1 : index
    %c0_25 = arith.constant 0 : index
    %c0_26 = arith.constant 0 : index
    %36 = vector.load %arg2[%c0_23, %c1_24, %c0_25, %c0_26] : memref<2x4x4x128xf32, #tpu.memory_space<vmem>>, vector<1x1x4x128xf32>
    %37 = vector.shape_cast %36 : vector<1x1x4x128xf32> to vector<4x128xf32>
    %38 = vector.shape_cast %37 : vector<4x128xf32> to vector<1x4x128xf32>
    %c1_27 = arith.constant 1 : index
    %c1_28 = arith.constant 1 : index
    %c0_29 = arith.constant 0 : index
    %c0_30 = arith.constant 0 : index
    %39 = vector.load %arg2[%c1_27, %c1_28, %c0_29, %c0_30] : memref<2x4x4x128xf32, #tpu.memory_space<vmem>>, vector<1x1x4x128xf32>
    %40 = vector.shape_cast %39 : vector<1x1x4x128xf32> to vector<4x128xf32>
    %41 = vector.shape_cast %40 : vector<4x128xf32> to vector<1x4x128xf32>
    %42 = vector.broadcast %32 : vector<2x1x128xf32> to vector<2x4x128xf32>
    %43 = vector.broadcast %38 : vector<1x4x128xf32> to vector<2x4x128xf32>
    %44 = arith.mulf %42, %43 : vector<2x4x128xf32>
    %45 = arith.addf %21, %44 : vector<2x4x128xf32>
    %46 = vector.broadcast %35 : vector<2x1x128xf32> to vector<2x4x128xf32>
    %47 = vector.broadcast %41 : vector<1x4x128xf32> to vector<2x4x128xf32>
    %48 = arith.mulf %46, %47 : vector<2x4x128xf32>
    %49 = arith.subf %45, %48 : vector<2x4x128xf32>
    %50 = vector.broadcast %32 : vector<2x1x128xf32> to vector<2x4x128xf32>
    %51 = vector.broadcast %41 : vector<1x4x128xf32> to vector<2x4x128xf32>
    %52 = arith.mulf %50, %51 : vector<2x4x128xf32>
    %53 = arith.addf %29, %52 : vector<2x4x128xf32>
    %54 = vector.broadcast %35 : vector<2x1x128xf32> to vector<2x4x128xf32>
    %55 = vector.broadcast %38 : vector<1x4x128xf32> to vector<2x4x128xf32>
    %56 = arith.mulf %54, %55 : vector<2x4x128xf32>
    %57 = arith.addf %53, %56 : vector<2x4x128xf32>
    %c0_31 = arith.constant 0 : index
    %c0_32 = arith.constant 0 : index
    %c2 = arith.constant 2 : index
    %c0_33 = arith.constant 0 : index
    %58 = vector.load %arg1[%c0_31, %c0_32, %c2, %c0_33] : memref<2x2x4x128xf32, #tpu.memory_space<vmem>>, vector<1x2x1x128xf32>
    %59 = vector.shape_cast %58 : vector<1x2x1x128xf32> to vector<2x128xf32>
    %60 = vector.shape_cast %59 : vector<2x128xf32> to vector<2x1x128xf32>
    %c1_34 = arith.constant 1 : index
    %c0_35 = arith.constant 0 : index
    %c2_36 = arith.constant 2 : index
    %c0_37 = arith.constant 0 : index
    %61 = vector.load %arg1[%c1_34, %c0_35, %c2_36, %c0_37] : memref<2x2x4x128xf32, #tpu.memory_space<vmem>>, vector<1x2x1x128xf32>
    %62 = vector.shape_cast %61 : vector<1x2x1x128xf32> to vector<2x128xf32>
    %63 = vector.shape_cast %62 : vector<2x128xf32> to vector<2x1x128xf32>
    %c0_38 = arith.constant 0 : index
    %c2_39 = arith.constant 2 : index
    %c0_40 = arith.constant 0 : index
    %c0_41 = arith.constant 0 : index
    %64 = vector.load %arg2[%c0_38, %c2_39, %c0_40, %c0_41] : memref<2x4x4x128xf32, #tpu.memory_space<vmem>>, vector<1x1x4x128xf32>
    %65 = vector.shape_cast %64 : vector<1x1x4x128xf32> to vector<4x128xf32>
    %66 = vector.shape_cast %65 : vector<4x128xf32> to vector<1x4x128xf32>
    %c1_42 = arith.constant 1 : index
    %c2_43 = arith.constant 2 : index
    %c0_44 = arith.constant 0 : index
    %c0_45 = arith.constant 0 : index
    %67 = vector.load %arg2[%c1_42, %c2_43, %c0_44, %c0_45] : memref<2x4x4x128xf32, #tpu.memory_space<vmem>>, vector<1x1x4x128xf32>
    %68 = vector.shape_cast %67 : vector<1x1x4x128xf32> to vector<4x128xf32>
    %69 = vector.shape_cast %68 : vector<4x128xf32> to vector<1x4x128xf32>
    %70 = vector.broadcast %60 : vector<2x1x128xf32> to vector<2x4x128xf32>
    %71 = vector.broadcast %66 : vector<1x4x128xf32> to vector<2x4x128xf32>
    %72 = arith.mulf %70, %71 : vector<2x4x128xf32>
    %73 = arith.addf %49, %72 : vector<2x4x128xf32>
    %74 = vector.broadcast %63 : vector<2x1x128xf32> to vector<2x4x128xf32>
    %75 = vector.broadcast %69 : vector<1x4x128xf32> to vector<2x4x128xf32>
    %76 = arith.mulf %74, %75 : vector<2x4x128xf32>
    %77 = arith.subf %73, %76 : vector<2x4x128xf32>
    %78 = vector.broadcast %60 : vector<2x1x128xf32> to vector<2x4x128xf32>
    %79 = vector.broadcast %69 : vector<1x4x128xf32> to vector<2x4x128xf32>
    %80 = arith.mulf %78, %79 : vector<2x4x128xf32>
    %81 = arith.addf %57, %80 : vector<2x4x128xf32>
    %82 = vector.broadcast %63 : vector<2x1x128xf32> to vector<2x4x128xf32>
    %83 = vector.broadcast %66 : vector<1x4x128xf32> to vector<2x4x128xf32>
    %84 = arith.mulf %82, %83 : vector<2x4x128xf32>
    %85 = arith.addf %81, %84 : vector<2x4x128xf32>
    %c0_46 = arith.constant 0 : index
    %c0_47 = arith.constant 0 : index
    %c3 = arith.constant 3 : index
    %c0_48 = arith.constant 0 : index
    %86 = vector.load %arg1[%c0_46, %c0_47, %c3, %c0_48] : memref<2x2x4x128xf32, #tpu.memory_space<vmem>>, vector<1x2x1x128xf32>
    %87 = vector.shape_cast %86 : vector<1x2x1x128xf32> to vector<2x128xf32>
    %88 = vector.shape_cast %87 : vector<2x128xf32> to vector<2x1x128xf32>
    %c1_49 = arith.constant 1 : index
    %c0_50 = arith.constant 0 : index
    %c3_51 = arith.constant 3 : index
    %c0_52 = arith.constant 0 : index
    %89 = vector.load %arg1[%c1_49, %c0_50, %c3_51, %c0_52] : memref<2x2x4x128xf32, #tpu.memory_space<vmem>>, vector<1x2x1x128xf32>
    %90 = vector.shape_cast %89 : vector<1x2x1x128xf32> to vector<2x128xf32>
    %91 = vector.shape_cast %90 : vector<2x128xf32> to vector<2x1x128xf32>
    %c0_53 = arith.constant 0 : index
    %c3_54 = arith.constant 3 : index
    %c0_55 = arith.constant 0 : index
    %c0_56 = arith.constant 0 : index
    %92 = vector.load %arg2[%c0_53, %c3_54, %c0_55, %c0_56] : memref<2x4x4x128xf32, #tpu.memory_space<vmem>>, vector<1x1x4x128xf32>
    %93 = vector.shape_cast %92 : vector<1x1x4x128xf32> to vector<4x128xf32>
    %94 = vector.shape_cast %93 : vector<4x128xf32> to vector<1x4x128xf32>
    %c1_57 = arith.constant 1 : index
    %c3_58 = arith.constant 3 : index
    %c0_59 = arith.constant 0 : index
    %c0_60 = arith.constant 0 : index
    %95 = vector.load %arg2[%c1_57, %c3_58, %c0_59, %c0_60] : memref<2x4x4x128xf32, #tpu.memory_space<vmem>>, vector<1x1x4x128xf32>
    %96 = vector.shape_cast %95 : vector<1x1x4x128xf32> to vector<4x128xf32>
    %97 = vector.shape_cast %96 : vector<4x128xf32> to vector<1x4x128xf32>
    %98 = vector.broadcast %88 : vector<2x1x128xf32> to vector<2x4x128xf32>
    %99 = vector.broadcast %94 : vector<1x4x128xf32> to vector<2x4x128xf32>
    %100 = arith.mulf %98, %99 : vector<2x4x128xf32>
    %101 = arith.addf %77, %100 : vector<2x4x128xf32>
    %102 = vector.broadcast %91 : vector<2x1x128xf32> to vector<2x4x128xf32>
    %103 = vector.broadcast %97 : vector<1x4x128xf32> to vector<2x4x128xf32>
    %104 = arith.mulf %102, %103 : vector<2x4x128xf32>
    %105 = arith.subf %101, %104 : vector<2x4x128xf32>
    %106 = vector.broadcast %88 : vector<2x1x128xf32> to vector<2x4x128xf32>
    %107 = vector.broadcast %97 : vector<1x4x128xf32> to vector<2x4x128xf32>
    %108 = arith.mulf %106, %107 : vector<2x4x128xf32>
    %109 = arith.addf %85, %108 : vector<2x4x128xf32>
    %110 = vector.broadcast %91 : vector<2x1x128xf32> to vector<2x4x128xf32>
    %111 = vector.broadcast %94 : vector<1x4x128xf32> to vector<2x4x128xf32>
    %112 = arith.mulf %110, %111 : vector<2x4x128xf32>
    %113 = arith.addf %109, %112 : vector<2x4x128xf32>
    %c0_61 = arith.constant 0 : index
    %c0_62 = arith.constant 0 : index
    %c0_63 = arith.constant 0 : index
    %c0_64 = arith.constant 0 : index
    %114 = vector.load %arg3[%c0_61, %c0_62, %c0_63, %c0_64] : memref<2x2x4x128xf32, #tpu.memory_space<vmem>>, vector<1x2x4x128xf32>
    %115 = vector.shape_cast %114 : vector<1x2x4x128xf32> to vector<2x4x128xf32>
    %116 = vector.shape_cast %105 : vector<2x4x128xf32> to vector<1x2x4x128xf32>
    tpu.vector_store %arg3[%c0_61, %c0_62, %c0_63, %c0_64], %116 {strides = array<i32>} : memref<2x2x4x128xf32, #tpu.memory_space<vmem>>, vector<1x2x4x128xf32>,
    %c1_65 = arith.constant 1 : index
    %c0_66 = arith.constant 0 : index
    %c0_67 = arith.constant 0 : index
    %c0_68 = arith.constant 0 : index
    %117 = vector.load %arg3[%c1_65, %c0_66, %c0_67, %c0_68] : memref<2x2x4x128xf32, #tpu.memory_space<vmem>>, vector<1x2x4x128xf32>
    %118 = vector.shape_cast %117 : vector<1x2x4x128xf32> to vector<2x4x128xf32>
    %119 = vector.shape_cast %113 : vector<2x4x128xf32> to vector<1x2x4x128xf32>
    tpu.vector_store %arg3[%c1_65, %c0_66, %c0_67, %c0_68], %119 {strides = array<i32>} : memref<2x2x4x128xf32, #tpu.memory_space<vmem>>, vector<1x2x4x128xf32>,
    return
  }
  func.func @transform_0(%arg0: i32) -> (i32, i32, i32, i32) {
    %c0_i32 = arith.constant 0 : i32
    %c0_i32_0 = arith.constant 0 : i32
    %c0_i32_1 = arith.constant 0 : i32
    %c0_i32_2 = arith.constant 0 : i32
    return %c0_i32, %c0_i32_0, %c0_i32_1, %arg0 : i32, i32, i32, i32
  }
  func.func @transform_1(%arg0: i32) -> (i32, i32, i32, i32) {
    %c0_i32 = arith.constant 0 : i32
    %c0_i32_0 = arith.constant 0 : i32
    %c0_i32_1 = arith.constant 0 : i32
    %c0_i32_2 = arith.constant 0 : i32
    return %c0_i32, %c0_i32_0, %c0_i32_1, %arg0 : i32, i32, i32, i32
  }
  func.func @transform_2(%arg0: i32) -> (i32, i32, i32, i32) {
    %c0_i32 = arith.constant 0 : i32
    %c0_i32_0 = arith.constant 0 : i32
    %c0_i32_1 = arith.constant 0 : i32
    %c0_i32_2 = arith.constant 0 : i32
    return %c0_i32, %c0_i32_0, %c0_i32_1, %arg0 : i32, i32, i32, i32
  }
}

</mosaic_0001>

<llo_original>
// kernel: custom-call
$region0: #{custom-call}
  %s0 = inlined_call_operand.hbm [shape: c64[4,4,4,4], index: 0, kind: input, shape index: {}]
  %s1 = inlined_call_operand.vmem [shape: f32[4,4,4,4], index: 1, kind: output, shape index: {}]
  $region1: #{custom-call} parent=0
    #allocation0 [shape = 's32[1]{0}', space=sflag, size = 0x4, scoped, tag = 'scoped memory for custom-call']
    %2 = vsyncpa [#allocation0], 0
    %s3 = sshll.u32 %s1, 4
    %s4 = int_to_ptr.vmem [resolvable:$true] %s3
    %6 = dma.hbm_to_vmem [thread:$0]  %s0, 1024, %s4, [#allocation0]
    %7 = dma.done [#allocation0], 1024
    %8 = vsyncpa [#allocation0], 1

// kernel: custom-call.1
$region0: #{custom-call.1}
  %s0 = inlined_call_operand.hbm [shape: c64[4,4,4,4], index: 0, kind: input, shape index: {}]
  %s1 = inlined_call_operand.vmem [shape: f32[4,4,4,4], index: 1, kind: output, shape index: {}]
  %s2 = scalar_lea.hbm %s0, 1024
  $region1: #{custom-call.1} parent=0
    #allocation0 [shape = 's32[1]{0}', space=sflag, size = 0x4, scoped, tag = 'scoped memory for custom-call.1']
    %3 = vsyncpa [#allocation0], 0
    %s4 = sshll.u32 %s1, 4
    %s5 = int_to_ptr.vmem [resolvable:$true] %s4
    %7 = dma.hbm_to_vmem [thread:$0]  %s2, 1024, %s5, [#allocation0]
    %8 = dma.done [#allocation0], 1024
    %9 = vsyncpa [#allocation0], 1

// kernel: spectral_conv2d.1
$region0: #{spectral_conv2d.1}
  #allocation0 [shape = 'u32[]', space=smem, size = 0x4, offset = 0x4, fixed_abs, tag = 'smem constant byte address 0x4 - core index']
  #allocation1 [shape = 'u32[144,128]{1,0:T(1,128)}', space=vmem, size = 0x12000, scoped, tag = 'internal scratch']
  %s0 = inlined_call_operand.vmem [shape: f32[2,2,4,128], index: 0, kind: input, shape index: {}]
  %s1 = inlined_call_operand.vmem [shape: f32[2,4,4,128], index: 1, kind: input, shape index: {}]
  %s2 = inlined_call_operand.vmem [shape: f32[2,2,4,128], index: 2, kind: output, shape index: {}]
  %s3 = sld [smem:[#allocation0]]
  $region18: #{spectral_conv2d.1} parent=0
    _
  %s5 = ssub.s32 1, %s3
  %s6 = scalar_select 0, %s5, %s3
  // Predicated region
  $region2: #{spectral_conv2d.1} parent=0 // pred_check
    _
  $region3: #{spectral_conv2d.1} parent=0 // pred_check_branch
    %8 = sbr.rel (0) target = $region5
  $region4: #{spectral_conv2d.1} parent=0 // pred_region
    _
  $region5: #{spectral_conv2d.1} parent=0 // pred_fallthru
    _
  // Predicated region
  $region6: #{spectral_conv2d.1} parent=0 // pred_check
    _
  $region7: #{spectral_conv2d.1} parent=0 // pred_check_branch
    %10 = sbr.rel (0) target = $region9
  $region8: #{spectral_conv2d.1} parent=0 // pred_region
    _
  $region9: #{spectral_conv2d.1} parent=0 // pred_fallthru
    _
  %v11 = vld [vmem:[%s0] sm:$0x1]
  %v12 = vld [vmem:[%s0 + $0x4] sm:$0x1]
  %s13 = scalar_lea.vmem %s0, 8
  %v14 = vld [vmem:[%s13] sm:$0x1]
  %v15 = vld [vmem:[%s13 + $0x4] sm:$0x1]
  %v16 = vld [vmem:[%s1] sm:$0xf]
  %s17 = scalar_lea.vmem %s1, 16
  %v18 = vld [vmem:[%s17] sm:$0xf]
  %v19 = vlaneseq
  %v20 = vshrl.u32 %v19, 7
  %v21 = vsub.s32 0, %v20
  %v22 = vrot.slane %v11, %v21
  %v23 = vlaneseq
  %v24 = vshrl.u32 %v23, 7
  %v25 = vsub.s32 0, %v24
  %v26 = vrot.slane %v12, %v25
  %v27 = vmul.f32 %v22, %v16
  %v28 = vmul.f32 %v26, %v16
  %v29 = vadd.f32 %v27, 0.0
  %v30 = vadd.f32 %v28, 0.0
  %v31 = vlaneseq
  %v32 = vshrl.u32 %v31, 7
  %v33 = vsub.s32 0, %v32
  %v34 = vrot.slane %v14, %v33
  %v35 = vlaneseq
  %v36 = vshrl.u32 %v35, 7
  %v37 = vsub.s32 0, %v36
  %v38 = vrot.slane %v15, %v37
  %v39 = vmul.f32 %v34, %v18
  %v40 = vmul.f32 %v38, %v18
  %v41 = vsub.f32 %v29, %v39
  %v42 = vsub.f32 %v30, %v40
  %v43 = vmul.f32 %v22, %v18
  %v44 = vmul.f32 %v26, %v18
  %v45 = vadd.f32 %v43, 0.0
  %v46 = vadd.f32 %v44, 0.0
  %v47 = vmul.f32 %v34, %v16
  %v48 = vmul.f32 %v38, %v16
  %v49 = vadd.f32 %v45, %v47
  %v50 = vadd.f32 %v46, %v48
  %v51 = vld [vmem:[%s0 + $0x1] sm:$0x1]
  %v52 = vld [vmem:[%s0 + $0x5] sm:$0x1]
  %v53 = vld [vmem:[%s13 + $0x1] sm:$0x1]
  %v54 = vld [vmem:[%s13 + $0x5] sm:$0x1]
  %s55 = scalar_lea.vmem %s1, 4
  %v56 = vld [vmem:[%s55] sm:$0xf]
  %s57 = scalar_lea.vmem %s1, 20
  %v58 = vld [vmem:[%s57] sm:$0xf]
  %v59 = vlaneseq
  %v60 = vshrl.u32 %v59, 7
  %v61 = vsub.s32 0, %v60
  %v62 = vrot.slane %v51, %v61
  %v63 = vlaneseq
  %v64 = vshrl.u32 %v63, 7
  %v65 = vsub.s32 0, %v64
  %v66 = vrot.slane %v52, %v65
  %v67 = vmul.f32 %v62, %v56
  %v68 = vmul.f32 %v66, %v56
  %v69 = vadd.f32 %v41, %v67
  %v70 = vadd.f32 %v42, %v68
  %v71 = vlaneseq
  %v72 = vshrl.u32 %v71, 7
  %v73 = vsub.s32 0, %v72
  %v74 = vrot.slane %v53, %v73
  %v75 = vlaneseq
  %v76 = vshrl.u32 %v75, 7
  %v77 = vsub.s32 0, %v76
  %v78 = vrot.slane %v54, %v77
  %v79 = vmul.f32 %v74, %v58
  %v80 = vmul.f32 %v78, %v58
  %v81 = vsub.f32 %v69, %v79
  %v82 = vsub.f32 %v70, %v80
  %v83 = vmul.f32 %v62, %v58
  %v84 = vmul.f32 %v66, %v58
  %v85 = vadd.f32 %v49, %v83
  %v86 = vadd.f32 %v50, %v84
  %v87 = vmul.f32 %v74, %v56
  %v88 = vmul.f32 %v78, %v56
  %v89 = vadd.f32 %v85, %v87
  %v90 = vadd.f32 %v86, %v88
  %v91 = vld [vmem:[%s0 + $0x2] sm:$0x1]
  %v92 = vld [vmem:[%s0 + $0x6] sm:$0x1]
  %v93 = vld [vmem:[%s13 + $0x2] sm:$0x1]
  %v94 = vld [vmem:[%s13 + $0x6] sm:$0x1]
  %s95 = scalar_lea.vmem %s1, 8
  %v96 = vld [vmem:[%s95] sm:$0xf]
  %s97 = scalar_lea.vmem %s1, 24
  %v98 = vld [vmem:[%s97] sm:$0xf]
  %v99 = vlaneseq
  %v100 = vshrl.u32 %v99, 7
  %v101 = vsub.s32 0, %v100
  %v102 = vrot.slane %v91, %v101
  %v103 = vlaneseq
  %v104 = vshrl.u32 %v103, 7
  %v105 = vsub.s32 0, %v104
  %v106 = vrot.slane %v92, %v105
  %v107 = vmul.f32 %v102, %v96
  %v108 = vmul.f32 %v106, %v96
  %v109 = vadd.f32 %v81, %v107
  %v110 = vadd.f32 %v82, %v108
  %v111 = vlaneseq
  %v112 = vshrl.u32 %v111, 7
  %v113 = vsub.s32 0, %v112
  %v114 = vrot.slane %v93, %v113
  %v115 = vlaneseq
  %v116 = vshrl.u32 %v115, 7
  %v117 = vsub.s32 0, %v116
  %v118 = vrot.slane %v94, %v117
  %v119 = vmul.f32 %v114, %v98
  %v120 = vmul.f32 %v118, %v98
  %v121 = vsub.f32 %v109, %v119
  %v122 = vsub.f32 %v110, %v120
  %v123 = vmul.f32 %v102, %v98
  %v124 = vmul.f32 %v106, %v98
  %v125 = vadd.f32 %v89, %v123
  %v126 = vadd.f32 %v90, %v124
  %v127 = vmul.f32 %v114, %v96
  %v128 = vmul.f32 %v118, %v96
  %v129 = vadd.f32 %v125, %v127
  %v130 = vadd.f32 %v126, %v128
  %v131 = vld [vmem:[%s0 + $0x3] sm:$0x1]
  %v132 = vld [vmem:[%s0 + $0x7] sm:$0x1]
  %v133 = vld [vmem:[%s13 + $0x3] sm:$0x1]
  %v134 = vld [vmem:[%s13 + $0x7] sm:$0x1]
  %s135 = scalar_lea.vmem %s1, 12
  %v136 = vld [vmem:[%s135] sm:$0xf]
  %s137 = scalar_lea.vmem %s1, 28
  %v138 = vld [vmem:[%s137] sm:$0xf]
  %v139 = vlaneseq
  %v140 = vshrl.u32 %v139, 7
  %v141 = vsub.s32 0, %v140
  %v142 = vrot.slane %v131, %v141
  %v143 = vlaneseq
  %v144 = vshrl.u32 %v143, 7
  %v145 = vsub.s32 0, %v144
  %v146 = vrot.slane %v132, %v145
  %v147 = vmul.f32 %v142, %v136
  %v148 = vmul.f32 %v146, %v136
  %v149 = vadd.f32 %v121, %v147
  %v150 = vadd.f32 %v122, %v148
  %v151 = vlaneseq
  %v152 = vshrl.u32 %v151, 7
  %v153 = vsub.s32 0, %v152
  %v154 = vrot.slane %v133, %v153
  %v155 = vlaneseq
  %v156 = vshrl.u32 %v155, 7
  %v157 = vsub.s32 0, %v156
  %v158 = vrot.slane %v134, %v157
  %v159 = vmul.f32 %v154, %v138
  %v160 = vmul.f32 %v158, %v138
  %v161 = vsub.f32 %v149, %v159
  %v162 = vsub.f32 %v150, %v160
  %v163 = vmul.f32 %v142, %v138
  %v164 = vmul.f32 %v146, %v138
  %v165 = vadd.f32 %v129, %v163
  %v166 = vadd.f32 %v130, %v164
  %v167 = vmul.f32 %v154, %v136
  %v168 = vmul.f32 %v158, %v136
  %v169 = vadd.f32 %v165, %v167
  %v170 = vadd.f32 %v166, %v168
  %171 = vst [vmem:[%s2] sm:$0xf] %v161
  %172 = vst [vmem:[%s2 + $0x4] sm:$0xf] %v162
  %s173 = scalar_lea.vmem %s2, 8
  %174 = vst [vmem:[%s173] sm:$0xf] %v169
  %175 = vst [vmem:[%s173 + $0x4] sm:$0xf] %v170
  // Predicated region
  $region10: #{spectral_conv2d.1} parent=0 // pred_check
    _
  $region11: #{spectral_conv2d.1} parent=0 // pred_check_branch
    %177 = sbr.rel (0) target = $region13
  $region12: #{spectral_conv2d.1} parent=0 // pred_region
    _
  $region13: #{spectral_conv2d.1} parent=0 // pred_fallthru
    _
  // Predicated region
  $region14: #{spectral_conv2d.1} parent=0 // pred_check
    _
  $region15: #{spectral_conv2d.1} parent=0 // pred_check_branch
    %179 = sbr.rel (0) target = $region17
  $region16: #{spectral_conv2d.1} parent=0 // pred_region
    _
  $region17: #{spectral_conv2d.1} parent=0 // pred_fallthru
    _

// kernel: reverse.0
$region0: #{reverse.0}
  %s0 = inlined_call_operand.vmem [shape: f32[2,4,16,7], index: 0, kind: input, shape index: {}]
  %s1 = inlined_call_operand.vmem [shape: f32[2,4,16,7], index: 1, kind: output, shape index: {}]
  $region1: #{reverse.0} parent=0
    #allocation0 [shape = 'u8[65536]{0}', space=vmem, size = 0x10000, scoped, tag = 'operand span for operand 0']
    #allocation1 [shape = 'u8[32768]{0}', space=vmem, size = 0x8000, scoped, tag = 'operand span for operand 1']
    %s2 = scalar_lea.vmem [#allocation0], 8
    // Predicated region
    $region2: #{reverse.0} parent=1 // pred_check
      _
    $region3: #{reverse.0} parent=1 // pred_check_branch
      %4 = sbr.rel (0) target = $region5
    $region4: #{reverse.0} parent=1 // pred_region
      // Predicated region
      $region6: #{reverse.0} parent=4 // pred_check
        _
      $region7: #{reverse.0} parent=4 // pred_check_branch
        %6 = sbr.rel (0) target = $region9
      $region8: #{reverse.0} parent=4 // pred_region
        // Predicated region
        $region21: #{reverse.0} parent=8 // pred_check
          _
        $region22: #{reverse.0} parent=8 // pred_check_branch
          %35 = sbr.rel (0) target = $region24
        $region23: #{reverse.0} parent=8 // pred_region
          loop: start=0, step=1, limit=1
          $region25: #{reverse.0} parent=23 // loop_pre_header
            _
          $region26: #{reverse.0} parent=23 // loop_header
            %s37 = sphi 0, %s41
            %p38 = scmp.ge.s32.totalorder %s37, 1
            %s42 = sphi %s0, %s0
            %s43 = sphi %s2, %s2
          $region27: #{reverse.0} parent=23 // loop_header_branch
            %40 = sbr.rel (%p38) target = $region31
          $region28: #{reverse.0} parent=23 // loop_body
            %v44 = vld [vmem:[%s42] sm:$0xff]
            %45 = vst [vmem:[%s43] sm:$0xff] %v44
            %v46 = vld [vmem:[%s42 + $0x8] sm:$0xff]
            %47 = vst [vmem:[%s43 + $0x10] sm:$0xff] %v46
            %v48 = vld [vmem:[%s42 + $0x10] sm:$0xff]
            %49 = vst [vmem:[%s43 + $0x20] sm:$0xff] %v48
            %v50 = vld [vmem:[%s42 + $0x18] sm:$0xff]
            %51 = vst [vmem:[%s43 + $0x30] sm:$0xff] %v50
            %v52 = vld [vmem:[%s42 + $0x20] sm:$0xff]
            %53 = vst [vmem:[%s43 + $0x40] sm:$0xff] %v52
            %v54 = vld [vmem:[%s42 + $0x28] sm:$0xff]
            %55 = vst [vmem:[%s43 + $0x50] sm:$0xff] %v54
            %v56 = vld [vmem:[%s42 + $0x30] sm:$0xff]
            %57 = vst [vmem:[%s43 + $0x60] sm:$0xff] %v56
            %v58 = vld [vmem:[%s42 + $0x38] sm:$0xff]
            %59 = vst [vmem:[%s43 + $0x70] sm:$0xff] %v58
          $region29: #{reverse.0} parent=23 // loop_footer
            %s41 = sadd.s32 1, %s37
          $region30: #{reverse.0} parent=23 // loop_footer_branch
            %36 = sbr.rel target = $region26
          $region31: #{reverse.0} parent=23 // loop_exit
            _
        $region24: #{reverse.0} parent=8 // pred_fallthru
          _
        // Predicated region
        $region32: #{reverse.0} parent=8 // pred_check
          _
        $region33: #{reverse.0} parent=8 // pred_check_branch
          %61 = sbr.rel target = $region35
        $region34: #{reverse.0} parent=8 // pred_region
          _
        $region35: #{reverse.0} parent=8 // pred_fallthru
          _
      $region9: #{reverse.0} parent=4 // pred_fallthru
        _
      // Predicated region
      $region10: #{reverse.0} parent=4 // pred_check
        _
      $region11: #{reverse.0} parent=4 // pred_check_branch
        %8 = sbr.rel target = $region13
      $region12: #{reverse.0} parent=4 // pred_region
        loop: start=0, step=1, limit=1
        $region14: #{reverse.0} parent=12 // loop_pre_header
          _
        $region15: #{reverse.0} parent=12 // loop_header
          %s11 = sphi 0, %s15
          %p12 = scmp.ge.s32.totalorder %s11, 1
          %s16 = sphi %s0, %s0
          %s17 = sphi %s2, %s2
        $region16: #{reverse.0} parent=12 // loop_header_branch
          %14 = sbr.rel (%p12) target = $region20
        $region17: #{reverse.0} parent=12 // loop_body
          %v18 = vld [vmem:[%s16] sm:$0xff]
          %19 = vst [vmem:[%s17] sm:$0xff] %v18
          %v20 = vld [vmem:[%s16 + $0x8] sm:$0xff]
          %21 = vst [vmem:[%s17 + $0x10] sm:$0xff] %v20
          %v22 = vld [vmem:[%s16 + $0x10] sm:$0xff]
          %23 = vst [vmem:[%s17 + $0x20] sm:$0xff] %v22
          %v24 = vld [vmem:[%s16 + $0x18] sm:$0xff]
          %25 = vst [vmem:[%s17 + $0x30] sm:$0xff] %v24
          %v26 = vld [vmem:[%s16 + $0x20] sm:$0xff]
          %27 = vst [vmem:[%s17 + $0x40] sm:$0xff] %v26
          %v28 = vld [vmem:[%s16 + $0x28] sm:$0xff]
          %29 = vst [vmem:[%s17 + $0x50] sm:$0xff] %v28
          %v30 = vld [vmem:[%s16 + $0x30] sm:$0xff]
          %31 = vst [vmem:[%s17 + $0x60] sm:$0xff] %v30
          %v32 = vld [vmem:[%s16 + $0x38] sm:$0xff]
          %33 = vst [vmem:[%s17 + $0x70] sm:$0xff] %v32
        $region18: #{reverse.0} parent=12 // loop_footer
          %s15 = sadd.s32 1, %s11
        $region19: #{reverse.0} parent=12 // loop_footer_branch
          %10 = sbr.rel target = $region15
        $region20: #{reverse.0} parent=12 // loop_exit
          _
      $region13: #{reverse.0} parent=4 // pred_fallthru
        _
    $region5: #{reverse.0} parent=1 // pred_fallthru
      _
    %62 = vnop
    %s63 = scalar_lea.vmem [#allocation0], 7
    %v64 = vld [vmem:[%s63] ss:$-1 sm:$0xff]
    %v65 = vrot.slane %v64, 1
    %66 = vst [vmem:[#allocation1] sm:$0xff] %v65
    %s67 = scalar_lea.vmem [#allocation0], 8
    %s68 = scalar_lea.vmem %s67, 7 [#allocation0]
    %v69 = vld [vmem:[%s68] ss:$-1 sm:$0xff]
    %v70 = vrot.slane %v69, 1
    %v71 = vlaneseq
    %v72 = vshrl.u32 %v71, 7
    %vm73 = vcmp.lt.s32.totalorder %v72, 7
    %74 = vst.msk [vmem:[#allocation1] sm:$0xff] %vm73, %v70
    %s75 = scalar_lea.vmem [#allocation1], 8
    %s76 = scalar_lea.vmem [#allocation0], 16
    %s77 = scalar_lea.vmem %s76, 7 [#allocation0]
    %v78 = vld [vmem:[%s77] ss:$-1 sm:$0xff]
    %v79 = vrot.slane %v78, 1
    %80 = vst [vmem:[%s75] sm:$0xff] %v79
    %s81 = scalar_lea.vmem %s76, 8 [#allocation0]
    %s82 = scalar_lea.vmem %s81, 7 [#allocation0]
    %v83 = vld [vmem:[%s82] ss:$-1 sm:$0xff]
    %v84 = vrot.slane %v83, 1
    %v85 = vlaneseq
    %v86 = vshrl.u32 %v85, 7
    %vm87 = vcmp.lt.s32.totalorder %v86, 7
    %88 = vst.msk [vmem:[%s75] sm:$0xff] %vm87, %v84
    %s89 = scalar_lea.vmem [#allocation1], 16
    %s90 = scalar_lea.vmem [#allocation0], 32
    %s91 = scalar_lea.vmem %s90, 7 [#allocation0]
    %v92 = vld [vmem:[%s91] ss:$-1 sm:$0xff]
    %v93 = vrot.slane %v92, 1
    %94 = vst [vmem:[%s89] sm:$0xff] %v93
    %s95 = scalar_lea.vmem %s90, 8 [#allocation0]
    %s96 = scalar_lea.vmem %s95, 7 [#allocation0]
    %v97 = vld [vmem:[%s96] ss:$-1 sm:$0xff]
    %v98 = vrot.slane %v97, 1
    %v99 = vlaneseq
    %v100 = vshrl.u32 %v99, 7
    %vm101 = vcmp.lt.s32.totalorder %v100, 7
    %102 = vst.msk [vmem:[%s89] sm:$0xff] %vm101, %v98
    %s103 = scalar_lea.vmem [#allocation1], 24
    %s104 = scalar_lea.vmem [#allocation0], 48
    %s105 = scalar_lea.vmem %s104, 7 [#allocation0]
    %v106 = vld [vmem:[%s105] ss:$-1 sm:$0xff]
    %v107 = vrot.slane %v106, 1
    %108 = vst [vmem:[%s103] sm:$0xff] %v107
    %s109 = scalar_lea.vmem %s104, 8 [#allocation0]
    %s110 = scalar_lea.vmem %s109, 7 [#allocation0]
    %v111 = vld [vmem:[%s110] ss:$-1 sm:$0xff]
    %v112 = vrot.slane %v111, 1
    %v113 = vlaneseq
    %v114 = vshrl.u32 %v113, 7
    %vm115 = vcmp.lt.s32.totalorder %v114, 7
    %116 = vst.msk [vmem:[%s103] sm:$0xff] %vm115, %v112
    %s117 = scalar_lea.vmem [#allocation1], 32
    %s118 = scalar_lea.vmem [#allocation0], 64
    %s119 = scalar_lea.vmem %s118, 7 [#allocation0]
    %v120 = vld [vmem:[%s119] ss:$-1 sm:$0xff]
    %v121 = vrot.slane %v120, 1
    %122 = vst [vmem:[%s117] sm:$0xff] %v121
    %s123 = scalar_lea.vmem %s118, 8 [#allocation0]
    %s124 = scalar_lea.vmem %s123, 7 [#allocation0]
    %v125 = vld [vmem:[%s124] ss:$-1 sm:$0xff]
    %v126 = vrot.slane %v125, 1
    %v127 = vlaneseq
    %v128 = vshrl.u32 %v127, 7
    %vm129 = vcmp.lt.s32.totalorder %v128, 7
    %130 = vst.msk [vmem:[%s117] sm:$0xff] %vm129, %v126
    %s131 = scalar_lea.vmem [#allocation1], 40
    %s132 = scalar_lea.vmem [#allocation0], 80
    %s133 = scalar_lea.vmem %s132, 7 [#allocation0]
    %v134 = vld [vmem:[%s133] ss:$-1 sm:$0xff]
    %v135 = vrot.slane %v134, 1
    %136 = vst [vmem:[%s131] sm:$0xff] %v135
    %s137 = scalar_lea.vmem %s132, 8 [#allocation0]
    %s138 = scalar_lea.vmem %s137, 7 [#allocation0]
    %v139 = vld [vmem:[%s138] ss:$-1 sm:$0xff]
    %v140 = vrot.slane %v139, 1
    %v141 = vlaneseq
    %v142 = vshrl.u32 %v141, 7
    %vm143 = vcmp.lt.s32.totalorder %v142, 7
    %144 = vst.msk [vmem:[%s131] sm:$0xff] %vm143, %v140
    %s145 = scalar_lea.vmem [#allocation1], 48
    %s146 = scalar_lea.vmem [#allocation0], 96
    %s147 = scalar_lea.vmem %s146, 7 [#allocation0]
    %v148 = vld [vmem:[%s147] ss:$-1 sm:$0xff]
    %v149 = vrot.slane %v148, 1
    %150 = vst [vmem:[%s145] sm:$0xff] %v149
    %s151 = scalar_lea.vmem %s146, 8 [#allocation0]
    %s152 = scalar_lea.vmem %s151, 7 [#allocation0]
    %v153 = vld [vmem:[%s152] ss:$-1 sm:$0xff]
    %v154 = vrot.slane %v153, 1
    %v155 = vlaneseq
    %v156 = vshrl.u32 %v155, 7
    %vm157 = vcmp.lt.s32.totalorder %v156, 7
    %158 = vst.msk [vmem:[%s145] sm:$0xff] %vm157, %v154
    %s159 = scalar_lea.vmem [#allocation1], 56
    %s160 = scalar_lea.vmem [#allocation0], 112
    %s161 = scalar_lea.vmem %s160, 7 [#allocation0]
    %v162 = vld [vmem:[%s161] ss:$-1 sm:$0xff]
    %v163 = vrot.slane %v162, 1
    %164 = vst [vmem:[%s159] sm:$0xff] %v163
    %s165 = scalar_lea.vmem %s160, 8 [#allocation0]
    %s166 = scalar_lea.vmem %s165, 7 [#allocation0]
    %v167 = vld [vmem:[%s166] ss:$-1 sm:$0xff]
    %v168 = vrot.slane %v167, 1
    %v169 = vlaneseq
    %v170 = vshrl.u32 %v169, 7
    %vm171 = vcmp.lt.s32.totalorder %v170, 7
    %172 = vst.msk [vmem:[%s159] sm:$0xff] %vm171, %v168
    // Predicated region
    $region36: #{reverse.0} parent=1 // pred_check
      _
    $region37: #{reverse.0} parent=1 // pred_check_branch
      %174 = sbr.rel (0) target = $region39
    $region38: #{reverse.0} parent=1 // pred_region
      // Predicated region
      $region40: #{reverse.0} parent=38 // pred_check
        _
      $region41: #{reverse.0} parent=38 // pred_check_branch
        %176 = sbr.rel (0) target = $region43
      $region42: #{reverse.0} parent=38 // pred_region
        // Predicated region
        $region55: #{reverse.0} parent=42 // pred_check
          _
        $region56: #{reverse.0} parent=42 // pred_check_branch
          %205 = sbr.rel (0) target = $region58
        $region57: #{reverse.0} parent=42 // pred_region
          loop: start=0, step=1, limit=1
          $region59: #{reverse.0} parent=57 // loop_pre_header
            _
          $region60: #{reverse.0} parent=57 // loop_header
            %s207 = sphi 0, %s211
            %p208 = scmp.ge.s32.totalorder %s207, 1
            %s212 = sphi [#allocation1], [#allocation1]
            %s213 = sphi %s1, %s1
          $region61: #{reverse.0} parent=57 // loop_header_branch
            %210 = sbr.rel (%p208) target = $region65
          $region62: #{reverse.0} parent=57 // loop_body
            %v214 = vld [vmem:[%s212] sm:$0xff]
            %215 = vst [vmem:[%s213] sm:$0xff] %v214
            %v216 = vld [vmem:[%s212 + $0x8] sm:$0xff]
            %217 = vst [vmem:[%s213 + $0x8] sm:$0xff] %v216
            %v218 = vld [vmem:[%s212 + $0x10] sm:$0xff]
            %219 = vst [vmem:[%s213 + $0x10] sm:$0xff] %v218
            %v220 = vld [vmem:[%s212 + $0x18] sm:$0xff]
            %221 = vst [vmem:[%s213 + $0x18] sm:$0xff] %v220
            %v222 = vld [vmem:[%s212 + $0x20] sm:$0xff]
            %223 = vst [vmem:[%s213 + $0x20] sm:$0xff] %v222
            %v224 = vld [vmem:[%s212 + $0x28] sm:$0xff]
            %225 = vst [vmem:[%s213 + $0x28] sm:$0xff] %v224
            %v226 = vld [vmem:[%s212 + $0x30] sm:$0xff]
            %227 = vst [vmem:[%s213 + $0x30] sm:$0xff] %v226
            %v228 = vld [vmem:[%s212 + $0x38] sm:$0xff]
            %229 = vst [vmem:[%s213 + $0x38] sm:$0xff] %v228
          $region63: #{reverse.0} parent=57 // loop_footer
            %s211 = sadd.s32 1, %s207
          $region64: #{reverse.0} parent=57 // loop_footer_branch
            %206 = sbr.rel target = $region60
          $region65: #{reverse.0} parent=57 // loop_exit
            _
        $region58: #{reverse.0} parent=42 // pred_fallthru
          _
        // Predicated region
        $region66: #{reverse.0} parent=42 // pred_check
          _
        $region67: #{reverse.0} parent=42 // pred_check_branch
          %231 = sbr.rel target = $region69
        $region68: #{reverse.0} parent=42 // pred_region
          _
        $region69: #{reverse.0} parent=42 // pred_fallthru
          _
      $region43: #{reverse.0} parent=38 // pred_fallthru
        _
      // Predicated region
      $region44: #{reverse.0} parent=38 // pred_check
        _
      $region45: #{reverse.0} parent=38 // pred_check_branch
        %178 = sbr.rel target = $region47
      $region46: #{reverse.0} parent=38 // pred_region
        loop: start=0, step=1, limit=1
        $region48: #{reverse.0} parent=46 // loop_pre_header
          _
        $region49: #{reverse.0} parent=46 // loop_header
          %s181 = sphi 0, %s185
          %p182 = scmp.ge.s32.totalorder %s181, 1
          %s186 = sphi [#allocation1], [#allocation1]
          %s187 = sphi %s1, %s1
        $region50: #{reverse.0} parent=46 // loop_header_branch
          %184 = sbr.rel (%p182) target = $region54
        $region51: #{reverse.0} parent=46 // loop_body
          %v188 = vld [vmem:[%s186] sm:$0xff]
          %189 = vst [vmem:[%s187] sm:$0xff] %v188
          %v190 = vld [vmem:[%s186 + $0x8] sm:$0xff]
          %191 = vst [vmem:[%s187 + $0x8] sm:$0xff] %v190
          %v192 = vld [vmem:[%s186 + $0x10] sm:$0xff]
          %193 = vst [vmem:[%s187 + $0x10] sm:$0xff] %v192
          %v194 = vld [vmem:[%s186 + $0x18] sm:$0xff]
          %195 = vst [vmem:[%s187 + $0x18] sm:$0xff] %v194
          %v196 = vld [vmem:[%s186 + $0x20] sm:$0xff]
          %197 = vst [vmem:[%s187 + $0x20] sm:$0xff] %v196
          %v198 = vld [vmem:[%s186 + $0x28] sm:$0xff]
          %199 = vst [vmem:[%s187 + $0x28] sm:$0xff] %v198
          %v200 = vld [vmem:[%s186 + $0x30] sm:$0xff]
          %201 = vst [vmem:[%s187 + $0x30] sm:$0xff] %v200
          %v202 = vld [vmem:[%s186 + $0x38] sm:$0xff]
          %203 = vst [vmem:[%s187 + $0x38] sm:$0xff] %v202
        $region52: #{reverse.0} parent=46 // loop_footer
          %s185 = sadd.s32 1, %s181
        $region53: #{reverse.0} parent=46 // loop_footer_branch
          %180 = sbr.rel target = $region49
        $region54: #{reverse.0} parent=46 // loop_exit
          _
      $region47: #{reverse.0} parent=38 // pred_fallthru
        _
    $region39: #{reverse.0} parent=1 // pred_fallthru
      _
    %232 = vnop

</llo_original>
